<compile_context>
chip_gen: v5e
topology: v5e:2x2
jax: 0.10.0
libtpu: 0.0.40
codegen_flags: <defaults>
</compile_context>

<pallas_src>
import functools

import jax
import jax.numpy as jnp
from jax.experimental import pallas as pl
from jax.experimental.pallas import tpu as pltpu


def _round_up(x, m):
    return ((x + m - 1) // m) * m


def _cdiv(a, b):
    return (a + b - 1) // b


# --------------------------------------------------------------------------------------
# Kernel: fused 2-layer MLP over both heads.
#   o = sigmoid(relu(z @ W1 + b1) @ W2 + b2)
# W1 packs both heads side-by-side, W2 is block-diagonal; weights bf16, accum f32.
# --------------------------------------------------------------------------------------
def _fused_decoder_kernel(z_ref, w1_ref, b1_ref, w2_ref, b2_ref, o_ref):
    z = z_ref[...].astype(jnp.bfloat16)                      # bf16 MXU path
    h = jnp.dot(z, w1_ref[...], preferred_element_type=jnp.float32) + b1_ref[...]
    h = jnp.maximum(h, 0.0)                                   # ReLU (f32)
    y = jnp.dot(h.astype(jnp.bfloat16), w2_ref[...],
                preferred_element_type=jnp.float32) + b2_ref[...]
    o_ref[...] = jax.nn.sigmoid(y).astype(o_ref.dtype)


def _fused_forward(z, w1, b1, w2, b2, *, block_b):
    """One pallas_call over a batch grid; weights/biases pinned (constant index_map)."""
    b, k = z.shape
    h_pad = w1.shape[1]
    o_pad = w2.shape[1]
    grid = (pl.cdiv(b, block_b),)
    return pl.pallas_call(
        _fused_decoder_kernel,
        out_shape=jax.ShapeDtypeStruct((b, o_pad), jnp.float32),
        grid_spec=pltpu.PrefetchScalarGridSpec(
            num_scalar_prefetch=0,
            grid=grid,
            in_specs=[
                pl.BlockSpec((block_b, k), lambda i: (i, 0)),   # z tile (batch block)
                pl.BlockSpec((k, h_pad), lambda i: (0, 0)),     # W1 fused (pinned)
                pl.BlockSpec((1, h_pad), lambda i: (0, 0)),     # b1 fused (pinned)
                pl.BlockSpec((h_pad, o_pad), lambda i: (0, 0)), # W2 block-diag (pinned)
                pl.BlockSpec((1, o_pad), lambda i: (0, 0)),     # b2 fused (pinned)
            ],
            out_specs=pl.BlockSpec((block_b, o_pad), lambda i: (i, 0)),
        ),
        compiler_params=pltpu.CompilerParams(
            dimension_semantics=("parallel",)),
    )(z, w1, b1, w2, b2)


# --------------------------------------------------------------------------------------
# Parameter setup (mimics PyTorch default nn.Linear init) + one-time packing/padding.
# Weights are stored as (in_features, out_features) so the kernel computes y = z @ W + b.
# --------------------------------------------------------------------------------------
def init_decoder_params(key, latent_size, out_spacing_size, out_rels_size,
                        dtype=jnp.float32):
    def linear(key, fan_in, fan_out):
        kw, kb = jax.random.split(key)
        bound = 1.0 / jnp.sqrt(fan_in)
        w = jax.random.uniform(kw, (fan_in, fan_out), dtype, -bound, bound)
        b = jax.random.uniform(kb, (fan_out,), dtype, -bound, bound)
        return w, b

    k1, k2, k3, k4 = jax.random.split(key, 4)
    sw1, sb1 = linear(k1, latent_size, out_spacing_size * 5)
    sw2, sb2 = linear(k2, out_spacing_size * 5, out_spacing_size * 10)
    rw1, rb1 = linear(k3, latent_size, out_rels_size * 5)
    rw2, rb2 = linear(k4, out_rels_size * 5, out_rels_size * 10)
    raw = {"spacing": (sw1, sb1, sw2, sb2), "rels": (rw1, rb1, rw2, rb2)}
    packed = pack_decoder_params(raw, latent_size, out_spacing_size, out_rels_size)
    return raw, packed


def pack_decoder_params(raw, latent_size, out_spacing_size, out_rels_size,
                        weight_dtype=jnp.bfloat16):
    """Fuse both heads, zero-pad hidden/output lanes; weights -> bf16 (done once)."""
    sw1, sb1, sw2, sb2 = raw["spacing"]
    rw1, rb1, rw2, rb2 = raw["rels"]
    hs, hr = out_spacing_size * 5, out_rels_size * 5
    os_, or_ = out_spacing_size * 10, out_rels_size * 10

    h_pad = _round_up(hs + hr, 128)
    o_split = _round_up(os_, 64)              # rels head starts at lane-friendly offset
    o_pad = _round_up(o_split + or_, 128)

    # Layer 1: both heads side-by-side along the hidden axis. Padded columns are zero
    # weight + zero bias -> ReLU gives exactly 0 there.
    w1 = jnp.zeros((latent_size, h_pad), weight_dtype)
    w1 = w1.at[:, :hs].set(sw1.astype(weight_dtype))
    w1 = w1.at[:, hs:hs + hr].set(rw1.astype(weight_dtype))
    b1 = jnp.zeros((1, h_pad), jnp.float32)
    b1 = b1.at[0, :hs].set(sb1)
    b1 = b1.at[0, hs:hs + hr].set(rb1)

    # Layer 2: block-diagonal. spacing: hidden[:hs] -> out[:os_];
    # rels: hidden[hs:hs+hr] -> out[o_split:o_split+or_]. Padding is zero (sliced off).
    w2 = jnp.zeros((h_pad, o_pad), weight_dtype)
    w2 = w2.at[:hs, :os_].set(sw2.astype(weight_dtype))
    w2 = w2.at[hs:hs + hr, o_split:o_split + or_].set(rw2.astype(weight_dtype))
    b2 = jnp.zeros((1, o_pad), jnp.float32)
    b2 = b2.at[0, :os_].set(sb2)
    b2 = b2.at[0, o_split:o_split + or_].set(rb2)

    return {"w1": w1, "b1": b1, "w2": w2, "b2": b2}


# --------------------------------------------------------------------------------------
# Forward: equivalent of Decoder.forward(z) -> (out_spacing, out_rels)
# --------------------------------------------------------------------------------------
def decoder_forward(z, packed, *, out_spacing_size, out_rels_size,
                    max_block_b=2048, min_grid_steps=1):
    """min_grid_steps=1 is best on single-TC chips (v5e/v6e); pass 2 on v7x so the
    "parallel" batch grid shards across its two TensorCores for large batches."""
    b, _ = z.shape
    os_ = out_spacing_size * 10
    or_ = out_rels_size * 10
    o_split = _round_up(os_, 64)

    # Balanced batch blocks: padded rows < 1 block, big blocks amortize per-step overhead.
    n_steps = max(min_grid_steps, _cdiv(b, max_block_b))
    tb = _round_up(_cdiv(b, n_steps), 8)

    out = _fused_forward(z, packed["w1"], packed["b1"], packed["w2"], packed["b2"],
                         block_b=tb)
    # Padded output lanes hold sigmoid(0)=0.5 -> slice them off (both slices lane-aligned).
    return out[:, :os_], out[:, o_split:o_split + or_]


def _reference_forward(z, raw):
    """Pure-JAX f32 reference for correctness check."""
    def head(z, w1, b1, w2, b2):
        h = jnp.maximum(z @ w1 + b1, 0.0)
        return jax.nn.sigmoid(h @ w2 + b2)
    return head(z, *raw["spacing"]), head(z, *raw["rels"])


if __name__ == "__main__":
    latent_size = 50
    out_spacing_size = 6
    out_rels_size = 4
    batch = 2

    key = jax.random.PRNGKey(0)
    kz, kp, kz2 = jax.random.split(key, 3)
    z = jax.random.normal(kz, (batch, latent_size), jnp.float32)
    raw, packed = init_decoder_params(kp, latent_size, out_spacing_size, out_rels_size)

    fwd = jax.jit(functools.partial(decoder_forward,
                                    out_spacing_size=out_spacing_size,
                                    out_rels_size=out_rels_size))

    out_spacing, out_rels = fwd(z, packed)
    jax.block_until_ready((out_spacing, out_rels))

    # bf16 weights / activations on the MXU -> relaxed tolerance vs f32 reference.
    ref_spacing, ref_rels = _reference_forward(z, raw)
    assert out_spacing.shape == (batch, out_spacing_size * 10)
    assert out_rels.shape == (batch, out_rels_size * 10)
    assert jnp.allclose(out_spacing, ref_spacing, atol=2e-2)
    assert jnp.allclose(out_rels, ref_rels, atol=2e-2)

    # Also exercise a larger batch (single balanced block under the new heuristic) and
    # the explicit 2-step grid path (v7x-style core sharding).
    big_b = 300
    z_big = jax.random.normal(kz2, (big_b, latent_size), jnp.float32)
    big_spacing, big_rels = fwd(z_big, packed)
    jax.block_until_ready((big_spacing, big_rels))
    ref_bs, ref_br = _reference_forward(z_big, raw)
    assert big_spacing.shape == (big_b, out_spacing_size * 10)
    assert big_rels.shape == (big_b, out_rels_size * 10)
    assert jnp.allclose(big_spacing, ref_bs, atol=2e-2)
    assert jnp.allclose(big_rels, ref_br, atol=2e-2)

    fwd2 = jax.jit(functools.partial(decoder_forward,
                                     out_spacing_size=out_spacing_size,
                                     out_rels_size=out_rels_size,
                                     min_grid_steps=2))
    s2, r2 = fwd2(z_big, packed)
    jax.block_until_ready((s2, r2))
    assert jnp.allclose(s2, ref_bs, atol=2e-2)
    assert jnp.allclose(r2, ref_br, atol=2e-2)

    print("KERNEL_OK")
</pallas_src>

<mosaic_0001>
module attributes {stable_mosaic.version = 11 : i64} {
  func.func @_fused_decoder_kernel(%arg0: i32, %arg1: memref<8x50xf32, #tpu.memory_space<vmem>>, %arg2: memref<50x128xbf16, #tpu.memory_space<vmem>>, %arg3: memref<1x128xf32, #tpu.memory_space<vmem>>, %arg4: memref<128x128xbf16, #tpu.memory_space<vmem>>, %arg5: memref<1x128xf32, #tpu.memory_space<vmem>>, %arg6: memref<8x128xf32, #tpu.memory_space<vmem>>) attributes {dimension_semantics = [#tpu.dimension_semantics<parallel>], iteration_bounds = array<i64: 1>, scalar_prefetch = 0 : i64, scratch_operands = 0 : i64, tpu.core_type = #tpu.core_type<tc>, window_params = [{transform_indices = @transform_0, window_bounds = array<i64: 8, 50>}, {pipeline_mode = #tpu.pipeline_mode<synchronous>, transform_indices = @transform_1, window_bounds = array<i64: 50, 128>}, {pipeline_mode = #tpu.pipeline_mode<synchronous>, transform_indices = @transform_2, window_bounds = array<i64: 1, 128>}, {pipeline_mode = #tpu.pipeline_mode<synchronous>, transform_indices = @transform_3, window_bounds = array<i64: 128, 128>}, {pipeline_mode = #tpu.pipeline_mode<synchronous>, transform_indices = @transform_4, window_bounds = array<i64: 1, 128>}, {transform_indices = @transform_5, window_bounds = array<i64: 8, 128>}]} {
    %c0 = arith.constant 0 : index
    %c0_0 = arith.constant 0 : index
    %0 = vector.load %arg1[%c0, %c0_0] : memref<8x50xf32, #tpu.memory_space<vmem>>, vector<8x50xf32>
    %1 = arith.truncf %0 : vector<8x50xf32> to vector<8x50xbf16>
    %c0_1 = arith.constant 0 : index
    %c0_2 = arith.constant 0 : index
    %2 = vector.load %arg2[%c0_1, %c0_2] : memref<50x128xbf16, #tpu.memory_space<vmem>>, vector<50x128xbf16>
    %cst = arith.constant dense<0.000000e+00> : vector<8x128xf32>
    %3 = tpu.matmul %1, %2, %cst {dimension_numbers = #tpu.dot_dimension_numbers<[1], [0], [0], [1], [0, 0, 1, 1], [], []>} : vector<8x50xbf16>, vector<50x128xbf16>, vector<8x128xf32> -> vector<8x128xf32>
    %c0_3 = arith.constant 0 : index
    %c0_4 = arith.constant 0 : index
    %4 = vector.load %arg3[%c0_3, %c0_4] : memref<1x128xf32, #tpu.memory_space<vmem>>, vector<1x128xf32>
    %5 = vector.broadcast %4 : vector<1x128xf32> to vector<8x128xf32>
    %6 = arith.addf %3, %5 : vector<8x128xf32>
    %cst_5 = arith.constant 0.000000e+00 : f32
    %7 = vector.broadcast %cst_5 : f32 to vector<8x128xf32>
    %8 = arith.maximumf %6, %7 : vector<8x128xf32>
    %9 = arith.truncf %8 : vector<8x128xf32> to vector<8x128xbf16>
    %c0_6 = arith.constant 0 : index
    %c0_7 = arith.constant 0 : index
    %10 = vector.load %arg4[%c0_6, %c0_7] : memref<128x128xbf16, #tpu.memory_space<vmem>>, vector<128x128xbf16>
    %cst_8 = arith.constant dense<0.000000e+00> : vector<8x128xf32>
    %11 = tpu.matmul %9, %10, %cst_8 {dimension_numbers = #tpu.dot_dimension_numbers<[1], [0], [0], [1], [0, 0, 1, 1], [], []>} : vector<8x128xbf16>, vector<128x128xbf16>, vector<8x128xf32> -> vector<8x128xf32>
    %c0_9 = arith.constant 0 : index
    %c0_10 = arith.constant 0 : index
    %12 = vector.load %arg5[%c0_9, %c0_10] : memref<1x128xf32, #tpu.memory_space<vmem>>, vector<1x128xf32>
    %13 = vector.broadcast %12 : vector<1x128xf32> to vector<8x128xf32>
    %14 = arith.addf %11, %13 : vector<8x128xf32>
    %15 = arith.negf %14 : vector<8x128xf32>
    %16 = math.exp %15 : vector<8x128xf32>
    %cst_11 = arith.constant 1.000000e+00 : f32
    %17 = vector.broadcast %cst_11 : f32 to vector<8x128xf32>
    %18 = arith.addf %17, %16 : vector<8x128xf32>
    %19 = arith.divf %17, %18 : vector<8x128xf32>
    %c0_12 = arith.constant 0 : index
    %c0_13 = arith.constant 0 : index
    %20 = vector.load %arg6[%c0_12, %c0_13] : memref<8x128xf32, #tpu.memory_space<vmem>>, vector<8x128xf32>
    tpu.vector_store %arg6[%c0_12, %c0_13], %19 {strides = array<i32>} : memref<8x128xf32, #tpu.memory_space<vmem>>, vector<8x128xf32>,
    return
  }
  func.func @transform_0(%arg0: i32) -> (i32, i32) {
    %c0_i32 = arith.constant 0 : i32
    %c0_i32_0 = arith.constant 0 : i32
    return %arg0, %c0_i32 : i32, i32
  }
  func.func @transform_1(%arg0: i32) -> (i32, i32) {
    %c0_i32 = arith.constant 0 : i32
    %c0_i32_0 = arith.constant 0 : i32
    %c0_i32_1 = arith.constant 0 : i32
    return %c0_i32, %c0_i32_0 : i32, i32
  }
  func.func @transform_2(%arg0: i32) -> (i32, i32) {
    %c0_i32 = arith.constant 0 : i32
    %c0_i32_0 = arith.constant 0 : i32
    %c0_i32_1 = arith.constant 0 : i32
    return %c0_i32, %c0_i32_0 : i32, i32
  }
  func.func @transform_3(%arg0: i32) -> (i32, i32) {
    %c0_i32 = arith.constant 0 : i32
    %c0_i32_0 = arith.constant 0 : i32
    %c0_i32_1 = arith.constant 0 : i32
    return %c0_i32, %c0_i32_0 : i32, i32
  }
  func.func @transform_4(%arg0: i32) -> (i32, i32) {
    %c0_i32 = arith.constant 0 : i32
    %c0_i32_0 = arith.constant 0 : i32
    %c0_i32_1 = arith.constant 0 : i32
    return %c0_i32, %c0_i32_0 : i32, i32
  }
  func.func @transform_5(%arg0: i32) -> (i32, i32) {
    %c0_i32 = arith.constant 0 : i32
    %c0_i32_0 = arith.constant 0 : i32
    return %arg0, %c0_i32 : i32, i32
  }
}

</mosaic_0001>

<llo_original>
// kernel: decoder_forward.1
$region0: #{decoder_forward.1}
  #allocation0 [shape = 'u32[]', space=smem, size = 0x4, offset = 0x4, fixed_abs, tag = 'smem constant byte address 0x4 - core index']
  #allocation1 [shape = 'u32[72,128]{1,0:T(1,128)}', space=vmem, size = 0x9000, scoped, tag = 'internal scratch']
  %s0 = inlined_call_operand.hbm [shape: f32[2,50], index: 0, kind: input, shape index: {}]
  %s1 = inlined_call_operand.hbm [shape: bf16[50,128], index: 1, kind: input, shape index: {}]
  %s2 = inlined_call_operand.hbm [shape: f32[1,128], index: 2, kind: input, shape index: {}]
  %s3 = inlined_call_operand.hbm [shape: bf16[128,128], index: 3, kind: input, shape index: {}]
  %s4 = inlined_call_operand.vmem [shape: f32[1,128], index: 4, kind: input, shape index: {}]
  %s5 = inlined_call_operand.vmem [shape: f32[2,128], index: 5, kind: output, shape index: {}]
  %s6 = sld [smem:[#allocation0]]
  $region76: #{decoder_forward.1} parent=0
    _
  %s8 = ssub.s32 1, %s6
  %s9 = scalar_select 0, %s8, %s6
  $region1: #{decoder_forward.1} parent=0
    #allocation2 [shape = 'u8[4096]{0}', space=vmem, size = 0x1000, scoped, tag = 'input window, operand 0, single buffered']
    #allocation3 [shape = 's32[1]{0}', space=sflag, size = 0x4, scoped, tag = 'scoped memory for decoder_forward.1']
    #allocation4 [shape = 'u8[14336]{0}', space=vmem, size = 0x3800, scoped, tag = 'input window, operand 1, single buffered']
    #allocation5 [shape = 's32[1]{0}', space=sflag, size = 0x4, scoped, tag = 'scoped memory for decoder_forward.1']
    #allocation6 [shape = 'u8[512]{0}', space=vmem, size = 0x400, scoped, tag = 'input window, operand 2, single buffered']
    #allocation7 [shape = 'u8[32768]{0}', space=vmem, size = 0x8000, scoped, tag = 'input window, operand 3, single buffered']
    #allocation8 [shape = 's32[1]{0}', space=sflag, size = 0x4, scoped, tag = 'scoped memory for decoder_forward.1']
    #allocation9 [shape = 'u8[4096]{0}', space=vmem, size = 0x1000, scoped, tag = 'output window, operand 0, single buffered']
    %10 = vsyncpa [#allocation3], 0
    %11 = vsyncpa [#allocation5], 0
    %12 = vsyncpa [#allocation8], 0
    // Predicated region
    $region2: #{decoder_forward.1} parent=1 // pred_check
      _
    $region3: #{decoder_forward.1} parent=1 // pred_check_branch
      %14 = sbr.rel (0) target = $region5
    $region4: #{decoder_forward.1} parent=1 // pred_region
      %16 = vsyncadd [#allocation3], 96
      %s17 = sshll.u32 %s0, 4
      %s18 = int_to_ptr.hbm [resolvable:$true] %s17
      %s19 = sshll.u32 [#allocation2], 4
      %s20 = int_to_ptr.vmem [resolvable:$true] %s19
      %25 = dma.hbm_to_vmem [thread:$0]  %s18, 32, %s20, [#allocation3], 32, 32, 2
    $region5: #{decoder_forward.1} parent=1 // pred_fallthru
      _
    // Predicated region
    $region6: #{decoder_forward.1} parent=1 // pred_check
      _
    $region7: #{decoder_forward.1} parent=1 // pred_check_branch
      %27 = sbr.rel (0) target = $region9
    $region8: #{decoder_forward.1} parent=1 // pred_region
      %29 = vsyncadd [#allocation5], 0
      %s30 = sshll.u32 %s1, 4
      %s31 = int_to_ptr.hbm [resolvable:$true] %s30
      %s32 = sshll.u32 [#allocation4], 4
      %s33 = int_to_ptr.vmem [resolvable:$true] %s32
      %38 = dma.hbm_to_vmem [thread:$0]  %s31, 448, %s33, [#allocation5], 64, 64, 4
    $region9: #{decoder_forward.1} parent=1 // pred_fallthru
      _
    // Predicated region
    $region10: #{decoder_forward.1} parent=1 // pred_check
      _
    $region11: #{decoder_forward.1} parent=1 // pred_check_branch
      %40 = sbr.rel (0) target = $region13
    $region12: #{decoder_forward.1} parent=1 // pred_region
      %42 = vsyncadd [#allocation5], 0
      %s44 = sshll.u32 %s2, 4
      %s45 = int_to_ptr.hbm [resolvable:$true] %s44
      %s46 = sshll.u32 [#allocation6], 4
      %s47 = int_to_ptr.vmem [resolvable:$true] %s46
      %49 = dma.hbm_to_vmem [thread:$0]  %s45, 16, %s47, [#allocation5]
    $region13: #{decoder_forward.1} parent=1 // pred_fallthru
      _
    // Predicated region
    $region14: #{decoder_forward.1} parent=1 // pred_check
      _
    $region15: #{decoder_forward.1} parent=1 // pred_check_branch
      %51 = sbr.rel (0) target = $region17
    $region16: #{decoder_forward.1} parent=1 // pred_region
      %53 = vsyncadd [#allocation8], 0
      %s54 = sshll.u32 %s3, 4
      %s55 = int_to_ptr.hbm [resolvable:$true] %s54
      %s56 = sshll.u32 [#allocation7], 4
      %s57 = int_to_ptr.vmem [resolvable:$true] %s56
      %62 = dma.hbm_to_vmem [thread:$0]  %s55, 1024, %s57, [#allocation8], 64, 64, 4
    $region17: #{decoder_forward.1} parent=1 // pred_fallthru
      _
    // Predicated region
    $region18: #{decoder_forward.1} parent=1 // pred_check
      _
    $region19: #{decoder_forward.1} parent=1 // pred_check_branch
      %64 = sbr.rel (0) target = $region21
    $region20: #{decoder_forward.1} parent=1 // pred_region
      _
    $region21: #{decoder_forward.1} parent=1 // pred_fallthru
      _
    // Predicated region
    $region22: #{decoder_forward.1} parent=1 // pred_check
      _
    $region23: #{decoder_forward.1} parent=1 // pred_check_branch
      %66 = sbr.rel (0) target = $region25
    $region24: #{decoder_forward.1} parent=1 // pred_region
      %68 = dma.done [#allocation3], 128
    $region25: #{decoder_forward.1} parent=1 // pred_fallthru
      _
    // Predicated region
    $region26: #{decoder_forward.1} parent=1 // pred_check
      _
    $region27: #{decoder_forward.1} parent=1 // pred_check_branch
      %70 = sbr.rel (0) target = $region29
    $region28: #{decoder_forward.1} parent=1 // pred_region
      %72 = dma.done [#allocation5], 448
    $region29: #{decoder_forward.1} parent=1 // pred_fallthru
      _
    // Predicated region
    $region30: #{decoder_forward.1} parent=1 // pred_check
      _
    $region31: #{decoder_forward.1} parent=1 // pred_check_branch
      %74 = sbr.rel (0) target = $region33
    $region32: #{decoder_forward.1} parent=1 // pred_region
      %76 = dma.done [#allocation5], 16
    $region33: #{decoder_forward.1} parent=1 // pred_fallthru
      _
    // Predicated region
    $region34: #{decoder_forward.1} parent=1 // pred_check
      _
    $region35: #{decoder_forward.1} parent=1 // pred_check_branch
      %78 = sbr.rel (0) target = $region37
    $region36: #{decoder_forward.1} parent=1 // pred_region
      %80 = dma.done [#allocation8], 1024
    $region37: #{decoder_forward.1} parent=1 // pred_fallthru
      _
    %v82 = vld [vmem:[#allocation2] sm:$0xff]
    %v83 = vpack.c.bf16 %v82, %v82
    %v84 = vld [vmem:[#allocation4] sm:$0xf]
    %v85 = vld [vmem:[#allocation4 + $0x4] sm:$0xf]
    %v86 = vld [vmem:[#allocation4 + $0x8] sm:$0xf]
    %v87 = vld [vmem:[#allocation4 + $0xc] sm:$0xf]
    %v88 = vld [vmem:[#allocation4 + $0x10] sm:$0xf]
    %v89 = vld [vmem:[#allocation4 + $0x14] sm:$0xf]
    %v90 = vld [vmem:[#allocation4 + $0x18] sm:$0x1]
    %v91 = vld [vmem:[#allocation6] sm:$0x1]
    %v93 = vperm.slane %v91, 0
    %v102 = vunpack.c.l.b16 %v84
    %v103 = vunpack.c.l.b16 %v85
    %v104 = vunpack.c.l.b16 %v86
    %v105 = vunpack.c.l.b16 %v87
    %v106 = vunpack.c.l.b16 %v88
    %v107 = vunpack.c.l.b16 %v89
    %v108 = vunpack.c.l.b16 %v90
    %v109 = vpack.c.b16 %v103, %v102
    %v110 = vpack.c.b16 %v105, %v104
    %v111 = vpack.c.b16 %v107, %v106
    %v112 = vpack.c.b16 %v108, %v108
    %vm116 = vcmask 408576
    %v118 = vsel %vm116, %v83, 0
    %vm120 = vcmask 1040384
    %v122 = vsel %vm120, %v112, 0
    %124 = vmatpush.bf16.msra.mxu0 0
    %125 = vmatpush.bf16.msra.mxu0 0
    %126 = vmatpush.bf16.msra.mxu0 0
    %127 = vmatpush.bf16.msra.mxu0 0
    %128 = vmatpush.bf16.msra.mxu0 %v122
    %129 = vmatpush.bf16.msra.mxu0 %v111
    %130 = vmatpush.bf16.msra.mxu0 %v110
    %131 = vmatpush.bf16.msra.mxu0 %v109
    %132 = vmatmul.bf16.gmra.mxu0 %v118
    %v133 = vpop.f32.mrf.mxu0
    %v134 = vadd.f32 %v93, %v133
    %v135 = vpop.f32.mrf.mxu0
    %136 = vdwg.mxu0
    %v137 = vmax.f32 %v134, 0.0
    %v138 = vpack.c.bf16 %v137, %v137
    %v139 = vld [vmem:[#allocation7] sm:$0xf]
    %v140 = vld [vmem:[#allocation7 + $0x4] sm:$0xf]
    %v141 = vld [vmem:[#allocation7 + $0x8] sm:$0xf]
    %v142 = vld [vmem:[#allocation7 + $0xc] sm:$0xf]
    %v143 = vld [vmem:[#allocation7 + $0x10] sm:$0xf]
    %v144 = vld [vmem:[#allocation7 + $0x14] sm:$0xf]
    %v145 = vld [vmem:[#allocation7 + $0x18] sm:$0xf]
    %v146 = vld [vmem:[#allocation7 + $0x1c] sm:$0xf]
    %v147 = vld [vmem:[#allocation7 + $0x20] sm:$0xf]
    %v148 = vld [vmem:[#allocation7 + $0x24] sm:$0xf]
    %v149 = vld [vmem:[#allocation7 + $0x28] sm:$0xf]
    %v150 = vld [vmem:[#allocation7 + $0x2c] sm:$0xf]
    %v151 = vld [vmem:[#allocation7 + $0x30] sm:$0xf]
    %v152 = vld [vmem:[#allocation7 + $0x34] sm:$0xf]
    %v153 = vld [vmem:[#allocation7 + $0x38] sm:$0xf]
    %v154 = vld [vmem:[#allocation7 + $0x3c] sm:$0xf]
    %v155 = vld [vmem:[%s4] sm:$0x1]
    %v157 = vperm.slane %v155, 0
    %v175 = vunpack.c.l.b16 %v139
    %v176 = vunpack.c.l.b16 %v140
    %v177 = vunpack.c.l.b16 %v141
    %v178 = vunpack.c.l.b16 %v142
    %v179 = vunpack.c.l.b16 %v143
    %v180 = vunpack.c.l.b16 %v144
    %v181 = vunpack.c.l.b16 %v145
    %v182 = vunpack.c.l.b16 %v146
    %v183 = vunpack.c.l.b16 %v147
    %v184 = vunpack.c.l.b16 %v148
    %v185 = vunpack.c.l.b16 %v149
    %v186 = vunpack.c.l.b16 %v150
    %v187 = vunpack.c.l.b16 %v151
    %v188 = vunpack.c.l.b16 %v152
    %v189 = vunpack.c.l.b16 %v153
    %v190 = vunpack.c.l.b16 %v154
    %v191 = vpack.c.b16 %v176, %v175
    %v192 = vpack.c.b16 %v178, %v177
    %v193 = vpack.c.b16 %v180, %v179
    %v194 = vpack.c.b16 %v182, %v181
    %v195 = vpack.c.b16 %v184, %v183
    %v196 = vpack.c.b16 %v186, %v185
    %v197 = vpack.c.b16 %v188, %v187
    %v198 = vpack.c.b16 %v190, %v189
    %207 = vmatpush.bf16.msra.mxu0 %v198
    %208 = vmatpush.bf16.msra.mxu0 %v197
    %209 = vmatpush.bf16.msra.mxu0 %v196
    %210 = vmatpush.bf16.msra.mxu0 %v195
    %211 = vmatpush.bf16.msra.mxu0 %v194
    %212 = vmatpush.bf16.msra.mxu0 %v193
    %213 = vmatpush.bf16.msra.mxu0 %v192
    %214 = vmatpush.bf16.msra.mxu0 %v191
    %215 = vmatmul.bf16.gmra.mxu0 %v138
    %v216 = vpop.f32.mrf.mxu0
    %v217 = vadd.f32 %v157, %v216
    %v218 = vpop.f32.mrf.mxu0
    %219 = vdwg.mxu0
    %v220 = vxor.u32 %v217, 2147483648
    %v221 = vmul.f32 %v220, 1.442695
    %v222 = vpow.pop %v221
    %v223 = vadd.f32 %v222, 1.0
    %v224 = vrcp.pop %v223
    %v225 = vmul.f32 %v223, %v224
    %v226 = vsub.f32 1.0, %v225
    %v227 = vmul.f32 %v224, %v226
    %v228 = vadd.f32 %v224, %v227
    %vm229 = vweird.f32 %v223
    %vm230 = vweird.f32 %v224
    %vm231 = vmor %vm229, %vm230
    %v232 = vsel %vm231, %v224, %v228
    %v233 = vand.u32 2147483647, %v223
    %vm234 = vcmp.eq.f32.partialorder %v233, 8.507059e+37
    %v235 = vand.u32 %v223, 2147483648
    %v236 = vor.u32 1.1754944e-38, %v235
    %v237 = vsel %vm234, %v236, %v232
    %v238 = vmul.f32 1.0, %v237
    %239 = vst [vmem:[#allocation9] sm:$0xff] %v238
    // Predicated region
    $region38: #{decoder_forward.1} parent=1 // pred_check
      _
    $region39: #{decoder_forward.1} parent=1 // pred_check_branch
      %241 = sbr.rel (0) target = $region41
    $region40: #{decoder_forward.1} parent=1 // pred_region
      // Predicated region
      $region42: #{decoder_forward.1} parent=40 // pred_check
        _
      $region43: #{decoder_forward.1} parent=40 // pred_check_branch
        %243 = sbr.rel (0) target = $region45
      $region44: #{decoder_forward.1} parent=40 // pred_region
        // Predicated region
        $region46: #{decoder_forward.1} parent=44 // pred_check
          _
        $region47: #{decoder_forward.1} parent=44 // pred_check_branch
          %245 = sbr.rel target = $region49
        $region48: #{decoder_forward.1} parent=44 // pred_region
          // Predicated region
          $region61: #{decoder_forward.1} parent=48 // pred_check
            _
          $region62: #{decoder_forward.1} parent=48 // pred_check_branch
            %261 = sbr.rel (0) target = $region64
          $region63: #{decoder_forward.1} parent=48 // pred_region
            %s263 = ssub.s32 4, 1
            loop: start=0, step=1, limit=1
            $region65: #{decoder_forward.1} parent=63 // loop_pre_header
              _
            $region66: #{decoder_forward.1} parent=63 // loop_header
              %s265 = sphi 0, %s269
              %p266 = scmp.ge.s32.totalorder %s265, 1
              %s270 = sphi [#allocation9], [#allocation9]
              %s271 = sphi %s5, %s5
            $region67: #{decoder_forward.1} parent=63 // loop_header_branch
              %268 = sbr.rel (%p266) target = $region71
            $region68: #{decoder_forward.1} parent=63 // loop_body
              %v272 = vld [vmem:[%s270] sm:%s263]
              %273 = vst [vmem:[%s271] sm:%s263] %v272
            $region69: #{decoder_forward.1} parent=63 // loop_footer
              %s269 = sadd.s32 1, %s265
            $region70: #{decoder_forward.1} parent=63 // loop_footer_branch
              %264 = sbr.rel target = $region66
            $region71: #{decoder_forward.1} parent=63 // loop_exit
              _
          $region64: #{decoder_forward.1} parent=48 // pred_fallthru
            _
        $region49: #{decoder_forward.1} parent=44 // pred_fallthru
          _
        // Predicated region
        $region50: #{decoder_forward.1} parent=44 // pred_check
          _
        $region51: #{decoder_forward.1} parent=44 // pred_check_branch
          %247 = sbr.rel (0) target = $region53
        $region52: #{decoder_forward.1} parent=44 // pred_region
          %s249 = ssub.s32 4, 1
          loop: start=0, step=1, limit=1
          $region54: #{decoder_forward.1} parent=52 // loop_pre_header
            _
          $region55: #{decoder_forward.1} parent=52 // loop_header
            %s251 = sphi 0, %s255
            %p252 = scmp.ge.s32.totalorder %s251, 1
            %s256 = sphi [#allocation9], [#allocation9]
            %s257 = sphi %s5, %s5
          $region56: #{decoder_forward.1} parent=52 // loop_header_branch
            %254 = sbr.rel (%p252) target = $region60
          $region57: #{decoder_forward.1} parent=52 // loop_body
            %v258 = vld [vmem:[%s256] sm:%s249]
            %259 = vst [vmem:[%s257] sm:%s249] %v258
          $region58: #{decoder_forward.1} parent=52 // loop_footer
            %s255 = sadd.s32 1, %s251
          $region59: #{decoder_forward.1} parent=52 // loop_footer_branch
            %250 = sbr.rel target = $region55
          $region60: #{decoder_forward.1} parent=52 // loop_exit
            _
        $region53: #{decoder_forward.1} parent=44 // pred_fallthru
          _
      $region45: #{decoder_forward.1} parent=40 // pred_fallthru
        _
      %274 = vnop
    $region41: #{decoder_forward.1} parent=1 // pred_fallthru
      _
    // Predicated region
    $region72: #{decoder_forward.1} parent=1 // pred_check
      _
    $region73: #{decoder_forward.1} parent=1 // pred_check_branch
      %276 = sbr.rel (0) target = $region75
    $region74: #{decoder_forward.1} parent=1 // pred_region
      _
    $region75: #{decoder_forward.1} parent=1 // pred_fallthru
      _
    %277 = vsyncpa [#allocation3], 1
    %278 = vsyncpa [#allocation5], 1
    %279 = vsyncpa [#allocation8], 1

</llo_original>
